<compile_context>
chip_gen: v7x
topology: tpu7x:2x2x1
jax: 0.10.0
libtpu: 0.0.40
codegen_flags: <defaults>
</compile_context>

<pallas_src>
import functools

import jax
import jax.numpy as jnp
from jax.experimental import pallas as pl
from jax.experimental.pallas import tpu as pltpu


# -----------------------------------------------------------------------------
# Kernel 1: per-channel batch statistics, reading NCHW directly.
# Input viewed as (N*Cin, H*W); grid = (row_blocks, col_blocks) with the column
# (spatial) axis as the reduction.  The per-row reduction runs on the MXU
# (x @ ones) so the pass stays at the HBM floor; VPU only does x*x.
# -----------------------------------------------------------------------------
def _stats_kernel(x_ref, sum_ref, sq_ref):
    @pl.when(pl.program_id(1) == 0)
    def _():
        sum_ref[...] = jnp.zeros_like(sum_ref)
        sq_ref[...] = jnp.zeros_like(sq_ref)

    x = x_ref[...].astype(jnp.float32)                    # (TR, TS)
    ones = jnp.ones((x.shape[1], 8), dtype=jnp.float32)
    # All 8 result columns are identical row sums; the 8-wide shape just keeps
    # the (TR, 8) accumulator tile-friendly.
    sum_ref[...] += jnp.dot(x, ones, preferred_element_type=jnp.float32)
    sq_ref[...] += jnp.dot(x * x, ones, preferred_element_type=jnp.float32)


# -----------------------------------------------------------------------------
# Kernel 2: fused BN(affine) + ReLU + 2x2 avg-pool + 1x1 conv, NCHW output.
# -----------------------------------------------------------------------------
def _transition_kernel(x_ref, scale2_ref, shift2_ref, w_ref, o_ref):
    # x_ref      : (1, TH, Wo, 2*Cin)  TH rows of one image; the two Cin lane
    #                                  halves are the even-/odd-column samples.
    # scale2_ref : (1, 2*Cin)          BN scale, duplicated for both halves.
    # shift2_ref : (1, 2*Cin)
    # w_ref      : (Cout, Cin)         PyTorch 1x1 weight, 0.25 avg folded in.
    # o_ref      : (1, Cout, THo*Wo)   channel-major (NCHW) output rows.
    _, th, wo, cin2 = x_ref.shape
    cin = cin2 // 2
    tho = th // 2

    x = x_ref[0].astype(jnp.float32)                      # (TH, Wo, 2*Cin)
    scale2 = scale2_ref[...].reshape(1, 1, cin2)
    shift2 = shift2_ref[...].reshape(1, 1, cin2)
    a = jnp.maximum(x * scale2 + shift2, 0.0)             # BN (folded) + ReLU

    # 2x2 sum-pool, columns: even/odd-w samples are the two Cin lane halves.
    c = a[:, :, :cin] + a[:, :, cin:]                     # (TH, Wo, Cin)
    # 2x2 sum-pool, rows: free leading-dim split + VPU add.
    c = c.reshape(tho, 2, wo, cin)
    pooled = (c[:, 0] + c[:, 1]).reshape(tho * wo, cin)   # (S, Cin)

    # 1x1 conv (the 0.25 avg factor is already in w).  Computed channel-major
    # so the store is already NCHW -- no wrapper output transpose.  The f32
    # transpose is folded into the MXU operand path; operands are cast to the
    # weight dtype (bf16 path) only after the transpose.
    rhs = pooled.T.astype(w_ref.dtype)                    # (Cin, S)
    yt = jnp.dot(w_ref[...], rhs,
                 preferred_element_type=jnp.float32)      # (Cout, S)
    o_ref[0] = yt.astype(o_ref.dtype)


# -----------------------------------------------------------------------------
# Generation-aware sizing helpers
# -----------------------------------------------------------------------------
def _tpu_vmem_capacity():
    try:
        return int(pltpu.get_tpu_info().vmem_capacity_bytes)
    except Exception:
        return 64 * 1024 * 1024          # conservative (v7x-sized) fallback


def _pick_stats_tile(nrows, ncols, itemsize, target_bytes):
    """(TR, TS): TS %128==0 or full, TR %8==0 or full, block byte-capped."""
    ts = ncols
    if 8 * ncols * itemsize > target_bytes:
        best = None
        for d in range(128, ncols, 128):
            if ncols % d == 0 and 8 * d * itemsize <= target_bytes:
                best = d
        if best is not None:
            ts = best
    if nrows % 8 == 0:
        fits = [d for d in range(8, nrows + 1, 8)
                if nrows % d == 0 and d * ts * itemsize <= target_bytes]
        tr = max(fits) if fits else 8
    else:
        tr = nrows                       # full dim (only when N*Cin is small)
    return tr, ts


def _pick_row_tile(h, wo, cin2, itemsize, target_bytes):
    """Even TH dividing H (TH %8==0 or TH==H).  When TH<H the flattened output
    tile (TH/2)*Wo must be lane-aligned (%128) so the output block is legal and
    lane-dense.  Largest block under the cap, else the full image height."""
    if h * wo * cin2 * itemsize <= target_bytes:
        return h
    best = None
    for th in range(8, h, 8):
        if h % th:
            continue
        if ((th // 2) * wo) % 128:
            continue
        if th * wo * cin2 * itemsize <= target_bytes:
            best = th
    return best if best is not None else h


# -----------------------------------------------------------------------------
# Wrapper (NCHW in / NCHW out, matching the PyTorch module)
# -----------------------------------------------------------------------------
def transition_block_forward(x_nchw, gamma, beta, conv_w, eps=1e-5,
                             use_bf16=False, x_buffers=None):
    """x_nchw: (N, Cin, H, W) f32.  conv_w: (Cout, Cin, 1, 1) (PyTorch layout).
    use_bf16: stream the main-kernel input / run the MXU in bf16 (f32 accum).
    x_buffers: optional pipeline depth for the x BlockSpec (e.g. 3 on v7x)."""
    n, cin, h, w = x_nchw.shape
    cout = conv_w.shape[0]
    assert h % 2 == 0 and w % 2 == 0, "AvgPool2d(2,2) expects even H, W"
    ho, wo = h // 2, w // 2

    vmem_cap = _tpu_vmem_capacity()
    target = min(8 << 20, vmem_cap // 16)            # ~8 MiB v5e/v6e, ~4 MiB v7x
    vmem_limit = int(min(vmem_cap * 5 // 8, 80 << 20))

    # ---- Pallas kernel 1: batch statistics straight off the NCHW tensor ----
    rows, cols = n * cin, h * w
    tr, ts = _pick_stats_tile(rows, cols, 4, target)
    x2 = x_nchw.reshape(rows, cols)                  # free view of NCHW
    rsum, rsq = pl.pallas_call(
        _stats_kernel,
        out_shape=(jax.ShapeDtypeStruct((rows, 8), jnp.float32),
                   jax.ShapeDtypeStruct((rows, 8), jnp.float32)),
        grid_spec=pltpu.PrefetchScalarGridSpec(
            num_scalar_prefetch=0,
            grid=(rows // tr, cols // ts),
            in_specs=[pl.BlockSpec((tr, ts), lambda i, j: (i, j))],
            out_specs=(pl.BlockSpec((tr, 8), lambda i, j: (i, 0)),
                       pl.BlockSpec((tr, 8), lambda i, j: (i, 0)))),
        compiler_params=pltpu.CompilerParams(
            dimension_semantics=("parallel", "arbitrary"),
            vmem_limit_bytes=vmem_limit),
    )(x2)

    count = jnp.float32(n * h * w)
    ch_sum = rsum[:, 0].reshape(n, cin).sum(axis=0)  # combine over the batch
    ch_sq = rsq[:, 0].reshape(n, cin).sum(axis=0)
    mean = ch_sum / count
    # TODO(synk): E[x^2]-mean^2 can lose precision for strongly off-center data;
    # a shifted / two-pass variance would be more robust.
    var = jnp.maximum(ch_sq / count - mean * mean, 0.0)
    scale = gamma / jnp.sqrt(var + eps)              # BN -> y = x*scale + shift
    shift = beta - mean * scale

    # ---- Pallas kernel 2: fused BN + ReLU + 2x2 pool + 1x1 conv ----
    in_dtype = jnp.bfloat16 if use_bf16 else jnp.float32
    itemsize = 2 if use_bf16 else 4
    # The single remaining relayout pass (cast fused in on the bf16 path),
    # followed by a FREE reshape pairing adjacent columns on the lane axis.
    x_nhwc = jnp.transpose(x_nchw.astype(in_dtype), (0, 2, 3, 1))
    x_lanes = x_nhwc.reshape(n, h, wo, 2 * cin)      # (N, H, Wo, 2*Cin)

    th = _pick_row_tile(h, wo, 2 * cin, itemsize, target)
    tho = th // 2
    s_tile = tho * wo
    nj = h // th

    scale2 = jnp.concatenate([scale, scale]).reshape(1, 2 * cin).astype(jnp.float32)
    shift2 = jnp.concatenate([shift, shift]).reshape(1, 2 * cin).astype(jnp.float32)
    w_oc = (conv_w[:, :, 0, 0] * 0.25).astype(in_dtype)   # (Cout, Cin), 0.25 folded

    x_spec_kwargs = {}
    if x_buffers is not None:                        # e.g. 3 on v7x if DMA exposed
        x_spec_kwargs["pipeline_mode"] = pl.Buffered(x_buffers)

    # NOTE: the output block's lane dim is s_tile (>=128 whenever H is tiled);
    # for tiny toy configs (Ho*Wo < 128, Cout < 128) stores are lane-masked but
    # correct -- irrelevant for DenseNet-sized transitions.
    out = pl.pallas_call(
        _transition_kernel,
        out_shape=jax.ShapeDtypeStruct((n, cout, ho * wo), jnp.float32),
        grid_spec=pltpu.PrefetchScalarGridSpec(
            num_scalar_prefetch=0,
            grid=(n, nj),
            in_specs=[pl.BlockSpec((1, th, wo, 2 * cin),
                                   lambda i, j: (i, j, 0, 0), **x_spec_kwargs),
                      pl.BlockSpec((1, 2 * cin), lambda i, j: (0, 0)),
                      pl.BlockSpec((1, 2 * cin), lambda i, j: (0, 0)),
                      pl.BlockSpec((cout, cin), lambda i, j: (0, 0))],
            out_specs=pl.BlockSpec((1, cout, s_tile), lambda i, j: (i, 0, j))),
        compiler_params=pltpu.CompilerParams(
            dimension_semantics=("parallel", "parallel"),
            vmem_limit_bytes=vmem_limit),
    )(x_lanes, scale2, shift2, w_oc)

    # Output is already channel-major; only a free reshape to NCHW remains.
    return out.reshape(n, cout, ho, wo)


# -----------------------------------------------------------------------------
# Pure-JAX reference (mirrors the PyTorch module in training mode)
# -----------------------------------------------------------------------------
def _reference(x, gamma, beta, conv_w, eps=1e-5):
    mean = x.mean(axis=(0, 2, 3))
    var = x.var(axis=(0, 2, 3))                      # biased variance
    y = (x - mean[None, :, None, None]) / jnp.sqrt(var[None, :, None, None] + eps)
    y = y * gamma[None, :, None, None] + beta[None, :, None, None]
    y = jnp.maximum(y, 0.0)
    y = jnp.einsum('nchw,oc->nohw', y, conv_w[:, :, 0, 0])
    n, co, hh, ww = y.shape
    return y.reshape(n, co, hh // 2, 2, ww // 2, 2).mean(axis=(3, 5))


if __name__ == "__main__":
    N, CIN, COUT, H, W = 2, 4, 8, 16, 16

    key = jax.random.PRNGKey(0)
    kx, kg, kb, kw = jax.random.split(key, 4)
    x = jax.random.normal(kx, (N, CIN, H, W), dtype=jnp.float32)
    gamma = 1.0 + 0.1 * jax.random.normal(kg, (CIN,), dtype=jnp.float32)
    beta = 0.1 * jax.random.normal(kb, (CIN,), dtype=jnp.float32)
    conv_w = jax.random.normal(kw, (COUT, CIN, 1, 1), dtype=jnp.float32) * 0.5

    ref = _reference(x, gamma, beta, conv_w)

    # f32 path (exact module semantics)
    fwd_f32 = jax.jit(functools.partial(transition_block_forward, use_bf16=False))
    out = jax.block_until_ready(fwd_f32(x, gamma, beta, conv_w))
    assert out.shape == (N, COUT, H // 2, W // 2)
    assert jnp.allclose(out, ref, atol=1e-3, rtol=1e-3), "f32 kernel mismatch"

    # bf16 streaming / MXU path (f32 accumulation, f32 batch statistics)
    fwd_bf16 = jax.jit(functools.partial(transition_block_forward, use_bf16=True))
    out_bf16 = jax.block_until_ready(fwd_bf16(x, gamma, beta, conv_w))
    assert jnp.allclose(out_bf16, ref, atol=1e-1, rtol=5e-2), "bf16 kernel mismatch"

    print("KERNEL_OK")
</pallas_src>

<mosaic_0001>
module attributes {stable_mosaic.version = 11 : i64} {
  func.func @_stats_kernel(%arg0: i32, %arg1: i32, %arg2: memref<8x256xf32, #tpu.memory_space<vmem>>, %arg3: memref<8x8xf32, #tpu.memory_space<vmem>>, %arg4: memref<8x8xf32, #tpu.memory_space<vmem>>) attributes {dimension_semantics = [#tpu.dimension_semantics<parallel>, #tpu.dimension_semantics<arbitrary>], iteration_bounds = array<i64: 1, 1>, scalar_prefetch = 0 : i64, scratch_operands = 0 : i64, tpu.core_type = #tpu.core_type<tc>, window_params = [{transform_indices = @transform_0, window_bounds = array<i64: 8, 256>}, {transform_indices = @transform_1, window_bounds = array<i64: 8, 8>}, {transform_indices = @transform_2, window_bounds = array<i64: 8, 8>}]} {
    %c0_i32 = arith.constant 0 : i32
    %0 = arith.cmpi eq, %arg1, %c0_i32 : i32
    %1 = arith.extui %0 : i1 to i32
    %c0_i32_0 = arith.constant 0 : i32
    %2 = arith.cmpi ne, %1, %c0_i32_0 : i32
    scf.if %2 {
      %cst_12 = arith.constant 0.000000e+00 : f32
      %14 = vector.broadcast %cst_12 : f32 to vector<8x8xf32>
      %c0_13 = arith.constant 0 : index
      %c0_14 = arith.constant 0 : index
      %15 = vector.load %arg3[%c0_13, %c0_14] : memref<8x8xf32, #tpu.memory_space<vmem>>, vector<8x8xf32>
      tpu.vector_store %arg3[%c0_13, %c0_14], %14 {strides = array<i32>} : memref<8x8xf32, #tpu.memory_space<vmem>>, vector<8x8xf32>,
      %cst_15 = arith.constant 0.000000e+00 : f32
      %16 = vector.broadcast %cst_15 : f32 to vector<8x8xf32>
      %c0_16 = arith.constant 0 : index
      %c0_17 = arith.constant 0 : index
      %17 = vector.load %arg4[%c0_16, %c0_17] : memref<8x8xf32, #tpu.memory_space<vmem>>, vector<8x8xf32>
      tpu.vector_store %arg4[%c0_16, %c0_17], %16 {strides = array<i32>} : memref<8x8xf32, #tpu.memory_space<vmem>>, vector<8x8xf32>,
    } else {
    }
    %c0 = arith.constant 0 : index
    %c0_1 = arith.constant 0 : index
    %3 = vector.load %arg2[%c0, %c0_1] : memref<8x256xf32, #tpu.memory_space<vmem>>, vector<8x256xf32>
    %cst = arith.constant 1.000000e+00 : f32
    %4 = vector.broadcast %cst : f32 to vector<256x8xf32>
    %c0_2 = arith.constant 0 : index
    %c0_3 = arith.constant 0 : index
    %5 = vector.load %arg3[%c0_2, %c0_3] : memref<8x8xf32, #tpu.memory_space<vmem>>, vector<8x8xf32>
    %cst_4 = arith.constant dense<0.000000e+00> : vector<8x8xf32>
    %6 = tpu.matmul %3, %4, %cst_4 {dimension_numbers = #tpu.dot_dimension_numbers<[1], [0], [0], [1], [0, 0, 1, 1], [], []>} : vector<8x256xf32>, vector<256x8xf32>, vector<8x8xf32> -> vector<8x8xf32>
    %7 = arith.addf %5, %6 : vector<8x8xf32>
    %c0_5 = arith.constant 0 : index
    %c0_6 = arith.constant 0 : index
    %8 = vector.load %arg3[%c0_5, %c0_6] : memref<8x8xf32, #tpu.memory_space<vmem>>, vector<8x8xf32>
    tpu.vector_store %arg3[%c0_5, %c0_6], %7 {strides = array<i32>} : memref<8x8xf32, #tpu.memory_space<vmem>>, vector<8x8xf32>,
    %c0_7 = arith.constant 0 : index
    %c0_8 = arith.constant 0 : index
    %9 = vector.load %arg4[%c0_7, %c0_8] : memref<8x8xf32, #tpu.memory_space<vmem>>, vector<8x8xf32>
    %10 = arith.mulf %3, %3 : vector<8x256xf32>
    %cst_9 = arith.constant dense<0.000000e+00> : vector<8x8xf32>
    %11 = tpu.matmul %10, %4, %cst_9 {dimension_numbers = #tpu.dot_dimension_numbers<[1], [0], [0], [1], [0, 0, 1, 1], [], []>} : vector<8x256xf32>, vector<256x8xf32>, vector<8x8xf32> -> vector<8x8xf32>
    %12 = arith.addf %9, %11 : vector<8x8xf32>
    %c0_10 = arith.constant 0 : index
    %c0_11 = arith.constant 0 : index
    %13 = vector.load %arg4[%c0_10, %c0_11] : memref<8x8xf32, #tpu.memory_space<vmem>>, vector<8x8xf32>
    tpu.vector_store %arg4[%c0_10, %c0_11], %12 {strides = array<i32>} : memref<8x8xf32, #tpu.memory_space<vmem>>, vector<8x8xf32>,
    return
  }
  func.func @transform_0(%arg0: i32, %arg1: i32) -> (i32, i32) {
    %c0_i32 = arith.constant 0 : i32
    return %arg0, %arg1 : i32, i32
  }
  func.func @transform_1(%arg0: i32, %arg1: i32) -> (i32, i32) {
    %c0_i32 = arith.constant 0 : i32
    %c0_i32_0 = arith.constant 0 : i32
    return %arg0, %c0_i32 : i32, i32
  }
  func.func @transform_2(%arg0: i32, %arg1: i32) -> (i32, i32) {
    %c0_i32 = arith.constant 0 : i32
    %c0_i32_0 = arith.constant 0 : i32
    return %arg0, %c0_i32 : i32, i32
  }
}

module attributes {stable_mosaic.version = 11 : i64} {
  func.func @_transition_kernel(%arg0: i32, %arg1: i32, %arg2: memref<1x16x8x8xf32, #tpu.memory_space<vmem>>, %arg3: memref<1x8xf32, #tpu.memory_space<vmem>>, %arg4: memref<1x8xf32, #tpu.memory_space<vmem>>, %arg5: memref<8x4xf32, #tpu.memory_space<vmem>>, %arg6: memref<1x8x64xf32, #tpu.memory_space<vmem>>) attributes {dimension_semantics = [#tpu.dimension_semantics<parallel>, #tpu.dimension_semantics<parallel>], iteration_bounds = array<i64: 2, 1>, scalar_prefetch = 0 : i64, scratch_operands = 0 : i64, tpu.core_type = #tpu.core_type<tc>, window_params = [{transform_indices = @transform_0, window_bounds = array<i64: 1, 16, 8, 8>}, {pipeline_mode = #tpu.pipeline_mode<synchronous>, transform_indices = @transform_1, window_bounds = array<i64: 1, 8>}, {pipeline_mode = #tpu.pipeline_mode<synchronous>, transform_indices = @transform_2, window_bounds = array<i64: 1, 8>}, {pipeline_mode = #tpu.pipeline_mode<synchronous>, transform_indices = @transform_3, window_bounds = array<i64: 8, 4>}, {transform_indices = @transform_4, window_bounds = array<i64: 1, 8, 64>}]} {
    %c0 = arith.constant 0 : index
    %c0_0 = arith.constant 0 : index
    %c0_1 = arith.constant 0 : index
    %c0_2 = arith.constant 0 : index
    %0 = vector.load %arg2[%c0, %c0_0, %c0_1, %c0_2] : memref<1x16x8x8xf32, #tpu.memory_space<vmem>>, vector<1x16x8x8xf32>
    %1 = vector.shape_cast %0 : vector<1x16x8x8xf32> to vector<16x8x8xf32>
    %c0_3 = arith.constant 0 : index
    %c0_4 = arith.constant 0 : index
    %2 = vector.load %arg3[%c0_3, %c0_4] : memref<1x8xf32, #tpu.memory_space<vmem>>, vector<1x8xf32>
    %3 = vector.shape_cast %2 : vector<1x8xf32> to vector<1x1x8xf32>
    %c0_5 = arith.constant 0 : index
    %c0_6 = arith.constant 0 : index
    %4 = vector.load %arg4[%c0_5, %c0_6] : memref<1x8xf32, #tpu.memory_space<vmem>>, vector<1x8xf32>
    %5 = vector.shape_cast %4 : vector<1x8xf32> to vector<1x1x8xf32>
    %6 = vector.broadcast %3 : vector<1x1x8xf32> to vector<16x8x8xf32>
    %7 = arith.mulf %1, %6 : vector<16x8x8xf32>
    %8 = vector.broadcast %5 : vector<1x1x8xf32> to vector<16x8x8xf32>
    %9 = arith.addf %7, %8 : vector<16x8x8xf32>
    %cst = arith.constant 0.000000e+00 : f32
    %10 = vector.broadcast %cst : f32 to vector<16x8x8xf32>
    %11 = arith.maximumf %9, %10 : vector<16x8x8xf32>
    %12 = vector.extract_strided_slice %11 {offsets = [0, 0, 0], sizes = [16, 8, 4], strides = [1, 1, 1]} : vector<16x8x8xf32> to vector<16x8x4xf32>
    %13 = vector.extract_strided_slice %11 {offsets = [0, 0, 4], sizes = [16, 8, 4], strides = [1, 1, 1]} : vector<16x8x8xf32> to vector<16x8x4xf32>
    %14 = arith.addf %12, %13 : vector<16x8x4xf32>
    %15 = vector.shape_cast %14 : vector<16x8x4xf32> to vector<8x2x8x4xf32>
    %16 = vector.extract_strided_slice %15 {offsets = [0, 0, 0, 0], sizes = [8, 1, 8, 4], strides = [1, 1, 1, 1]} : vector<8x2x8x4xf32> to vector<8x1x8x4xf32>
    %17 = vector.shape_cast %16 : vector<8x1x8x4xf32> to vector<8x8x4xf32>
    %18 = vector.extract_strided_slice %15 {offsets = [0, 1, 0, 0], sizes = [8, 1, 8, 4], strides = [1, 1, 1, 1]} : vector<8x2x8x4xf32> to vector<8x1x8x4xf32>
    %19 = vector.shape_cast %18 : vector<8x1x8x4xf32> to vector<8x8x4xf32>
    %20 = arith.addf %17, %19 : vector<8x8x4xf32>
    %21 = vector.shape_cast %20 : vector<8x8x4xf32> to vector<64x4xf32>
    %22 = tpu.transpose %21, [1, 0] : vector<64x4xf32> -> vector<4x64xf32>
    %c0_7 = arith.constant 0 : index
    %c0_8 = arith.constant 0 : index
    %23 = vector.load %arg5[%c0_7, %c0_8] : memref<8x4xf32, #tpu.memory_space<vmem>>, vector<8x4xf32>
    %cst_9 = arith.constant dense<0.000000e+00> : vector<8x64xf32>
    %24 = tpu.matmul %23, %22, %cst_9 {dimension_numbers = #tpu.dot_dimension_numbers<[1], [0], [0], [1], [0, 0, 1, 1], [], []>} : vector<8x4xf32>, vector<4x64xf32>, vector<8x64xf32> -> vector<8x64xf32>
    %c0_10 = arith.constant 0 : index
    %c0_11 = arith.constant 0 : index
    %c0_12 = arith.constant 0 : index
    %25 = vector.load %arg6[%c0_10, %c0_11, %c0_12] : memref<1x8x64xf32, #tpu.memory_space<vmem>>, vector<1x8x64xf32>
    %26 = vector.shape_cast %25 : vector<1x8x64xf32> to vector<8x64xf32>
    %27 = vector.shape_cast %24 : vector<8x64xf32> to vector<1x8x64xf32>
    tpu.vector_store %arg6[%c0_10, %c0_11, %c0_12], %27 {strides = array<i32>} : memref<1x8x64xf32, #tpu.memory_space<vmem>>, vector<1x8x64xf32>,
    return
  }
  func.func @transform_0(%arg0: i32, %arg1: i32) -> (i32, i32, i32, i32) {
    %c0_i32 = arith.constant 0 : i32
    %c0_i32_0 = arith.constant 0 : i32
    %c0_i32_1 = arith.constant 0 : i32
    return %arg0, %arg1, %c0_i32, %c0_i32_0 : i32, i32, i32, i32
  }
  func.func @transform_1(%arg0: i32, %arg1: i32) -> (i32, i32) {
    %c0_i32 = arith.constant 0 : i32
    %c0_i32_0 = arith.constant 0 : i32
    %c0_i32_1 = arith.constant 0 : i32
    return %c0_i32, %c0_i32_0 : i32, i32
  }
  func.func @transform_2(%arg0: i32, %arg1: i32) -> (i32, i32) {
    %c0_i32 = arith.constant 0 : i32
    %c0_i32_0 = arith.constant 0 : i32
    %c0_i32_1 = arith.constant 0 : i32
    return %c0_i32, %c0_i32_0 : i32, i32
  }
  func.func @transform_3(%arg0: i32, %arg1: i32) -> (i32, i32) {
    %c0_i32 = arith.constant 0 : i32
    %c0_i32_0 = arith.constant 0 : i32
    %c0_i32_1 = arith.constant 0 : i32
    return %c0_i32, %c0_i32_0 : i32, i32
  }
  func.func @transform_4(%arg0: i32, %arg1: i32) -> (i32, i32, i32) {
    %c0_i32 = arith.constant 0 : i32
    %c0_i32_0 = arith.constant 0 : i32
    return %arg0, %c0_i32, %arg1 : i32, i32, i32
  }
}

</mosaic_0001>

<llo_original>
// kernel: squeeze.3
$region0: #{squeeze.3}
  %s0 = inlined_call_operand.vmem [shape: f32[8], index: 0, kind: input, shape index: {}]
  %s1 = inlined_call_operand.vmem [shape: f32[2,4], index: 1, kind: output, shape index: {}]
  $region1: #{squeeze.3} parent=0
    #allocation0 [shape = 'u8[4096]{0}', space=vmem, size = 0x1000, scoped, tag = 'scoped mem for output reshape']
    #allocation1 [shape = 'u8[4096]{0}', space=vmem, size = 0x1000, scoped, tag = 'scoped mem for input reshape']
    %s3 = sshllo.u32 0, 1
    %v4 = vld [vmem:[%s0] sm:%s3]
    %5 = vst [vmem:[#allocation1] sm:%s3] %v4
    %v6 = vld [vmem:[#allocation1] sm:$0x1]
    %vm7 = vcmask 31744
    %8 = vst.msk [vmem:[#allocation0] sm:$0x1] %vm7, %v6
    %v9 = vld [vmem:[#allocation1] sm:$0x1]
    %10 = vrot.lane.b32.xlu0 %v9, 124
    %v11 = vpop.permute.xlu0 %10
    %vm12 = vcmask 31744
    %s13 = scalar_lea.vmem [#allocation0], 1
    %14 = vst.msk [vmem:[%s13] sm:$0x1] %vm12, %v11
    %s16 = sshllo.u32 0, 2
    %v18 = vld [vmem:[#allocation0] sm:%s16]
    %s19 = sshllo.u32 0, 2
    %20 = vst [vmem:[%s1] sm:%s19] %v18

// kernel: transition_block_forward.2
$region0: #{transition_block_forward.2}
  #allocation0 [shape = 'u32[]', space=smem, size = 0x4, offset = 0x4, fixed_abs, tag = 'smem constant byte address 0x4 - core index']
  #allocation1 [shape = 'u32[144,128]{1,0:T(1,128)}', space=vmem, size = 0x12000, scoped, tag = 'internal scratch']
  %s0 = inlined_call_operand.vmem [shape: f32[8,256], index: 0, kind: input, shape index: {}]
  %s1 = inlined_call_operand.vmem [shape: f32[8,8], index: 1, kind: output, shape index: {0}]
  %s2 = inlined_call_operand.vmem [shape: f32[8,8], index: 2, kind: output, shape index: {1}]
  %3 = xla_tuple %s1, %s2
  %s4 = sld [smem:[#allocation0]]
  $region26: #{transition_block_forward.2} parent=0
    _
  %s6 = ssub.s32 1, %s4
  %s7 = scalar_select 0, %s6, %s4
  // Predicated region
  $region2: #{transition_block_forward.2} parent=0 // pred_check
    _
  $region3: #{transition_block_forward.2} parent=0 // pred_check_branch
    %9 = sbr.rel (0) target = $region5
  $region4: #{transition_block_forward.2} parent=0 // pred_region
    _
  $region5: #{transition_block_forward.2} parent=0 // pred_fallthru
    _
  %p10 = scmp.eq.s32.totalorder 0, 0
  // Predicated region
  $region6: #{transition_block_forward.2} parent=0 // pred_check
    %p11 = pneg %p10
  $region7: #{transition_block_forward.2} parent=0 // pred_check_branch
    %13 = sbr.rel (%p11) target = $region9
  $region8: #{transition_block_forward.2} parent=0 // pred_region
    %vm14 = vcmask 64512
    %15 = vst.msk [vmem:[%s1] sm:$0xff] %vm14, 0.0
    %16 = vst.msk [vmem:[%s2] sm:$0xff] %vm14, 0.0
  $region9: #{transition_block_forward.2} parent=0 // pred_fallthru
    _
  %v17 = vld [vmem:[%s0] sm:$0xff]
  %v18 = vld [vmem:[%s0 + $0x8] sm:$0xff]
  %v19 = vld [vmem:[%s1] sm:$0xff]
  %20 = vmatprep.subr.mxu0 0.0
  %21 = vmatpush1.msra.mxu0 1.0
  %22 = vmatprep.subr.mxu0 0.0
  %23 = vmatpush1.msra.mxu0 1.0
  %24 = vmatprep.subr.mxu0 0.0
  %25 = vmatpush1.msra.mxu0 1.0
  %26 = vmatprep.subr.mxu0 0.0
  %27 = vmatpush1.msra.mxu0 1.0
  %28 = vmatprep.subr.mxu0 0.0
  %29 = vmatpush1.msra.mxu0 1.0
  %30 = vmatprep.subr.mxu0 0.0
  %31 = vmatpush1.msra.mxu0 1.0
  %32 = vmatprep.subr.mxu0 0.0
  %33 = vmatpush1.msra.mxu0 1.0
  %34 = vmatprep.subr.mxu0 0.0
  %35 = vmatpush1.msra.mxu0 1.0
  %36 = vmatprep.subr.mxu0 0.0
  %37 = vmatpush1.msra.mxu0 1.0
  %38 = vmatprep.subr.mxu0 0.0
  %39 = vmatpush1.msra.mxu0 1.0
  %40 = vmatprep.subr.mxu0 0.0
  %41 = vmatpush1.msra.mxu0 1.0
  %42 = vmatprep.subr.mxu0 0.0
  %43 = vmatpush1.msra.mxu0 1.0
  %44 = vmatprep.subr.mxu0 0.0
  %45 = vmatpush1.msra.mxu0 1.0
  %46 = vmatprep.subr.mxu0 0.0
  %47 = vmatpush1.msra.mxu0 1.0
  %48 = vmatprep.subr.mxu0 0.0
  %49 = vmatpush1.msra.mxu0 1.0
  %50 = vmatprep.subr.mxu0 0.0
  %51 = vmatpush1.msra.mxu0 1.0
  %52 = vmatprep.subr.mxu0 0.0
  %53 = vmatpush1.msra.mxu0 1.0
  %54 = vmatprep.subr.mxu0 0.0
  %55 = vmatpush1.msra.mxu0 1.0
  %56 = vmatprep.subr.mxu0 0.0
  %57 = vmatpush1.msra.mxu0 1.0
  %58 = vmatprep.subr.mxu0 0.0
  %59 = vmatpush1.msra.mxu0 1.0
  %60 = vmatprep.subr.mxu0 0.0
  %61 = vmatpush1.msra.mxu0 1.0
  %62 = vmatprep.subr.mxu0 0.0
  %63 = vmatpush1.msra.mxu0 1.0
  %64 = vmatprep.subr.mxu0 0.0
  %65 = vmatpush1.msra.mxu0 1.0
  %66 = vmatprep.subr.mxu0 0.0
  %67 = vmatpush1.msra.mxu0 1.0
  %68 = vmatprep.subr.mxu0 0.0
  %69 = vmatpush1.msra.mxu0 1.0
  %70 = vmatprep.subr.mxu0 0.0
  %71 = vmatpush1.msra.mxu0 1.0
  %72 = vmatprep.subr.mxu0 0.0
  %73 = vmatpush1.msra.mxu0 1.0
  %74 = vmatprep.subr.mxu0 0.0
  %75 = vmatpush1.msra.mxu0 1.0
  %76 = vmatprep.subr.mxu0 0.0
  %77 = vmatpush1.msra.mxu0 1.0
  %78 = vmatprep.subr.mxu0 0.0
  %79 = vmatpush1.msra.mxu0 1.0
  %80 = vmatprep.subr.mxu0 0.0
  %81 = vmatpush1.msra.mxu0 1.0
  %82 = vmatprep.subr.mxu0 0.0
  %83 = vmatpush1.msra.mxu0 1.0
  %84 = vmatprep.mubr.f32.mxu0 %v18
  %85 = vmatmul.mubr.f32.gmra.mrb[0].mxu0 %v17
  %v86 = vpop.f32.mrb[0].mxu0
  %v87 = vadd.f32 0.0, %v86
  %v88 = vpop.f32.mrb[0].mxu0
  %89 = vdwg.mxu0
  %v90 = vadd.f32 %v19, %v87
  %vm91 = vcmask 64512
  %92 = vst.msk [vmem:[%s1] sm:$0xff] %vm91, %v90
  %v93 = vld [vmem:[%s2] sm:$0xff]
  %v94 = vmul.f32 %v17, %v17
  %v95 = vmul.f32 %v18, %v18
  %96 = vmatprep.subr.mxu0 0.0
  %97 = vmatpush1.msra.mxu0 1.0
  %98 = vmatprep.subr.mxu0 0.0
  %99 = vmatpush1.msra.mxu0 1.0
  %100 = vmatprep.subr.mxu0 0.0
  %101 = vmatpush1.msra.mxu0 1.0
  %102 = vmatprep.subr.mxu0 0.0
  %103 = vmatpush1.msra.mxu0 1.0
  %104 = vmatprep.subr.mxu0 0.0
  %105 = vmatpush1.msra.mxu0 1.0
  %106 = vmatprep.subr.mxu0 0.0
  %107 = vmatpush1.msra.mxu0 1.0
  %108 = vmatprep.subr.mxu0 0.0
  %109 = vmatpush1.msra.mxu0 1.0
  %110 = vmatprep.subr.mxu0 0.0
  %111 = vmatpush1.msra.mxu0 1.0
  %112 = vmatprep.subr.mxu0 0.0
  %113 = vmatpush1.msra.mxu0 1.0
  %114 = vmatprep.subr.mxu0 0.0
  %115 = vmatpush1.msra.mxu0 1.0
  %116 = vmatprep.subr.mxu0 0.0
  %117 = vmatpush1.msra.mxu0 1.0
  %118 = vmatprep.subr.mxu0 0.0
  %119 = vmatpush1.msra.mxu0 1.0
  %120 = vmatprep.subr.mxu0 0.0
  %121 = vmatpush1.msra.mxu0 1.0
  %122 = vmatprep.subr.mxu0 0.0
  %123 = vmatpush1.msra.mxu0 1.0
  %124 = vmatprep.subr.mxu0 0.0
  %125 = vmatpush1.msra.mxu0 1.0
  %126 = vmatprep.subr.mxu0 0.0
  %127 = vmatpush1.msra.mxu0 1.0
  %128 = vmatprep.subr.mxu0 0.0
  %129 = vmatpush1.msra.mxu0 1.0
  %130 = vmatprep.subr.mxu0 0.0
  %131 = vmatpush1.msra.mxu0 1.0
  %132 = vmatprep.subr.mxu0 0.0
  %133 = vmatpush1.msra.mxu0 1.0
  %134 = vmatprep.subr.mxu0 0.0
  %135 = vmatpush1.msra.mxu0 1.0
  %136 = vmatprep.subr.mxu0 0.0
  %137 = vmatpush1.msra.mxu0 1.0
  %138 = vmatprep.subr.mxu0 0.0
  %139 = vmatpush1.msra.mxu0 1.0
  %140 = vmatprep.subr.mxu0 0.0
  %141 = vmatpush1.msra.mxu0 1.0
  %142 = vmatprep.subr.mxu0 0.0
  %143 = vmatpush1.msra.mxu0 1.0
  %144 = vmatprep.subr.mxu0 0.0
  %145 = vmatpush1.msra.mxu0 1.0
  %146 = vmatprep.subr.mxu0 0.0
  %147 = vmatpush1.msra.mxu0 1.0
  %148 = vmatprep.subr.mxu0 0.0
  %149 = vmatpush1.msra.mxu0 1.0
  %150 = vmatprep.subr.mxu0 0.0
  %151 = vmatpush1.msra.mxu0 1.0
  %152 = vmatprep.subr.mxu0 0.0
  %153 = vmatpush1.msra.mxu0 1.0
  %154 = vmatprep.subr.mxu0 0.0
  %155 = vmatpush1.msra.mxu0 1.0
  %156 = vmatprep.subr.mxu0 0.0
  %157 = vmatpush1.msra.mxu0 1.0
  %158 = vmatprep.subr.mxu0 0.0
  %159 = vmatpush1.msra.mxu0 1.0
  %160 = vmatprep.mubr.f32.mxu0 %v95
  %161 = vmatmul.mubr.f32.gmra.mrb[0].mxu0 %v94
  %v162 = vpop.f32.mrb[0].mxu0
  %v163 = vadd.f32 0.0, %v162
  %v164 = vpop.f32.mrb[0].mxu0
  %165 = vdwg.mxu0
  %v166 = vadd.f32 %v93, %v163
  %167 = vst.msk [vmem:[%s2] sm:$0xff] %vm91, %v166
  // Predicated region
  $region10: #{transition_block_forward.2} parent=0 // pred_check
    _
  $region11: #{transition_block_forward.2} parent=0 // pred_check_branch
    %169 = sbr.rel (0) target = $region13
  $region12: #{transition_block_forward.2} parent=0 // pred_region
    _
  $region13: #{transition_block_forward.2} parent=0 // pred_fallthru
    _
  // Predicated region
  $region14: #{transition_block_forward.2} parent=0 // pred_check
    _
  $region15: #{transition_block_forward.2} parent=0 // pred_check_branch
    %171 = sbr.rel (0) target = $region17
  $region16: #{transition_block_forward.2} parent=0 // pred_region
    _
  $region17: #{transition_block_forward.2} parent=0 // pred_fallthru
    _
  // Predicated region
  $region18: #{transition_block_forward.2} parent=0 // pred_check
    _
  $region19: #{transition_block_forward.2} parent=0 // pred_check_branch
    %173 = sbr.rel (0) target = $region21
  $region20: #{transition_block_forward.2} parent=0 // pred_region
    _
  $region21: #{transition_block_forward.2} parent=0 // pred_fallthru
    _
  // Predicated region
  $region22: #{transition_block_forward.2} parent=0 // pred_check
    _
  $region23: #{transition_block_forward.2} parent=0 // pred_check_branch
    %175 = sbr.rel (0) target = $region25
  $region24: #{transition_block_forward.2} parent=0 // pred_region
    _
  $region25: #{transition_block_forward.2} parent=0 // pred_fallthru
    _

// kernel: transition_block_forward.3
$region0: #{transition_block_forward.3}
  #allocation0 [shape = 'u32[]', space=smem, size = 0x4, offset = 0x4, fixed_abs, tag = 'smem constant byte address 0x4 - core index']
  #allocation1 [shape = 'u32[144,128]{1,0:T(1,128)}', space=vmem, size = 0x12000, scoped, tag = 'internal scratch']
  %s0 = inlined_call_operand.vmem [shape: f32[2,16,8,8], index: 0, kind: input, shape index: {}]
  %s1 = inlined_call_operand.vmem [shape: f32[1,8], index: 1, kind: input, shape index: {}]
  %s2 = inlined_call_operand.vmem [shape: f32[1,8], index: 2, kind: input, shape index: {}]
  %s3 = inlined_call_operand.vmem [shape: f32[8,4], index: 3, kind: input, shape index: {}]
  %s4 = inlined_call_operand.vmem [shape: f32[2,8,64], index: 4, kind: output, shape index: {}]
  %s5 = sld [smem:[#allocation0]]
  $region49: #{transition_block_forward.3} parent=0
    _
  %s7 = ssub.s32 1, %s5
  %s8 = scalar_select 0, %s7, %s5
  loop: start=0, step=1, limit=4
  $region2: #{transition_block_forward.3} parent=0 // loop_pre_header
    _
  $region3: #{transition_block_forward.3} parent=0 // loop_header
    %s10 = sphi 0, %s14
    %p11 = scmp.ge.s32.totalorder %s10, 4
    %s17 = sphi 0, %s29
    %s18 = sphi 0, %s25
    %s19 = sphi 0, %s17
    %s20 = sphi 0, %s18
    %s21 = sphi 0, %s19
    %s22 = sphi 0, %s20
    %s34 = sphi 0, %s36
    %s37 = sphi 0, %s34
    %s38 = sphi 0, %s37
    %s54 = sphi 0, %s38
    %s58 = sphi 0, %s58
    %s60 = sphi 0, %s58
    %s61 = sphi 0, %s60
    %s75 = sphi 0, %s61
    %s79 = sphi 0, %s79
    %s81 = sphi 0, %s79
    %s82 = sphi 0, %s81
    %s96 = sphi 0, %s82
    %s100 = sphi 0, %s100
    %s102 = sphi 0, %s100
    %s103 = sphi 0, %s102
    %s117 = sphi 0, %s103
    %s125 = sphi 0, %s127
    %s128 = sphi 0, %s125
    %s129 = sphi 0, %s128
    %s145 = sphi 0, %s129
  $region4: #{transition_block_forward.3} parent=0 // loop_header_branch
    %13 = sbr.rel (%p11) target = $region8
  $region5: #{transition_block_forward.3} parent=0 // loop_body
    %s15 = ssub.s32 %s10, 1
    %s16 = ssub.s32 %s10, 2
    %s23 = sadd.s32 1, %s18
    %p24 = scmp.ge.s32.totalorder %s23, 1
    %s25 = scalar_select %p24, 0, %s23
    %s26 = sadd.s32 1, %s17
    %s27 = scalar_select %p24, %s26, %s17
    %p28 = scmp.ge.s32.totalorder %s27, 2
    %s29 = scalar_select %p28, 0, %s27
    %s30 = ssub.s32 %s17, %s29
    %s31 = ssub.s32 %s18, %s25
    %s32 = sor.u32 %s30, %s31
    %p33 = scmp.eq.s32.totalorder %s32, 0
    %s35 = sadd.s32 %s34, 1
    %s36 = scalar_select %p33, %s34, %s35
    %p39 = pneg %p33
    %p40 = scmp.eq.s32.totalorder %s10, 1
    %p41 = por %p39, %p40
    %p42 = scmp.ne.s32.totalorder %s34, %s37
    %p43 = scmp.eq.s32.totalorder %s10, 0
    %p44 = por %p42, %p43
    %p45 = scmp.ne.s32.totalorder %s34, %s37
    %p46 = scmp.eq.s32.totalorder %s15, 1
    %p47 = por %p45, %p46
    %p48 = scmp.ne.s32.totalorder %s37, %s38
    %p49 = scmp.eq.s32.totalorder %s15, 0
    %p50 = por %p48, %p49
    %p51 = scmp.ne.s32.totalorder %s37, %s38
    %p52 = scmp.eq.s32.totalorder %s16, 1
    %p53 = por %p51, %p52
    %p55 = scmp.ne.s32.totalorder %s38, %s54
    %p56 = scmp.eq.s32.totalorder %s16, 0
    %p57 = por %p55, %p56
    %s59 = sadd.s32 %s58, 1
    %p62 = scmp.eq.s32.totalorder %s10, 1
    %p63 = scmp.ne.s32.totalorder %s58, %s60
    %p64 = scmp.eq.s32.totalorder %s10, 0
    %p65 = por %p63, %p64
    %p66 = scmp.ne.s32.totalorder %s58, %s60
    %p67 = scmp.eq.s32.totalorder %s15, 1
    %p68 = por %p66, %p67
    %p69 = scmp.ne.s32.totalorder %s60, %s61
    %p70 = scmp.eq.s32.totalorder %s15, 0
    %p71 = por %p69, %p70
    %p72 = scmp.ne.s32.totalorder %s60, %s61
    %p73 = scmp.eq.s32.totalorder %s16, 1
    %p74 = por %p72, %p73
    %p76 = scmp.ne.s32.totalorder %s61, %s75
    %p77 = scmp.eq.s32.totalorder %s16, 0
    %p78 = por %p76, %p77
    %s80 = sadd.s32 %s79, 1
    %p83 = scmp.eq.s32.totalorder %s10, 1
    %p84 = scmp.ne.s32.totalorder %s79, %s81
    %p85 = scmp.eq.s32.totalorder %s10, 0
    %p86 = por %p84, %p85
    %p87 = scmp.ne.s32.totalorder %s79, %s81
    %p88 = scmp.eq.s32.totalorder %s15, 1
    %p89 = por %p87, %p88
    %p90 = scmp.ne.s32.totalorder %s81, %s82
    %p91 = scmp.eq.s32.totalorder %s15, 0
    %p92 = por %p90, %p91
    %p93 = scmp.ne.s32.totalorder %s81, %s82
    %p94 = scmp.eq.s32.totalorder %s16, 1
    %p95 = por %p93, %p94
    %p97 = scmp.ne.s32.totalorder %s82, %s96
    %p98 = scmp.eq.s32.totalorder %s16, 0
    %p99 = por %p97, %p98
    %s101 = sadd.s32 %s100, 1
    %p104 = scmp.eq.s32.totalorder %s10, 1
    %p105 = scmp.ne.s32.totalorder %s100, %s102
    %p106 = scmp.eq.s32.totalorder %s10, 0
    %p107 = por %p105, %p106
    %p108 = scmp.ne.s32.totalorder %s100, %s102
    %p109 = scmp.eq.s32.totalorder %s15, 1
    %p110 = por %p108, %p109
    %p111 = scmp.ne.s32.totalorder %s102, %s103
    %p112 = scmp.eq.s32.totalorder %s15, 0
    %p113 = por %p111, %p112
    %p114 = scmp.ne.s32.totalorder %s102, %s103
    %p115 = scmp.eq.s32.totalorder %s16, 1
    %p116 = por %p114, %p115
    %p118 = scmp.ne.s32.totalorder %s103, %s117
    %p119 = scmp.eq.s32.totalorder %s16, 0
    %p120 = por %p118, %p119
    %s121 = ssub.s32 %s17, %s29
    %s122 = ssub.s32 %s18, %s25
    %s123 = sor.u32 %s121, %s122
    %p124 = scmp.eq.s32.totalorder %s123, 0
    %s126 = sadd.s32 %s125, 1
    %s127 = scalar_select %p124, %s125, %s126
    %p130 = pneg %p124
    %p131 = scmp.eq.s32.totalorder %s10, 1
    %p132 = por %p130, %p131
    %p133 = scmp.ne.s32.totalorder %s125, %s128
    %p134 = scmp.eq.s32.totalorder %s10, 0
    %p135 = por %p133, %p134
    %p136 = scmp.ne.s32.totalorder %s125, %s128
    %p137 = scmp.eq.s32.totalorder %s15, 1
    %p138 = por %p136, %p137
    %p139 = scmp.ne.s32.totalorder %s128, %s129
    %p140 = scmp.eq.s32.totalorder %s15, 0
    %p141 = por %p139, %p140
    %p142 = scmp.ne.s32.totalorder %s128, %s129
    %p143 = scmp.eq.s32.totalorder %s16, 1
    %p144 = por %p142, %p143
    %p146 = scmp.ne.s32.totalorder %s129, %s145
    %p147 = scmp.eq.s32.totalorder %s16, 0
    %p148 = por %p146, %p147
    %p149 = scmp.le.s32.totalorder 1, %s10
    %p150 = scmp.lt.s32.totalorder %s10, 3
    %p151 = pnand %p149, %p150
    %p152 = pneg %p151
    // Predicated region
    $region9: #{transition_block_forward.3} parent=5 // pred_check
      _
    $region10: #{transition_block_forward.3} parent=5 // pred_check_branch
      %154 = sbr.rel (%p151) target = $region12
    $region11: #{transition_block_forward.3} parent=5 // pred_region
      %s155 = ssub.s32 %s10, 1
      // Predicated region
      $region13: #{transition_block_forward.3} parent=11 // pred_check
        %p156 = pneg %p71
      $region14: #{transition_block_forward.3} parent=11 // pred_check_branch
        %158 = sbr.rel (%p156) target = $region16
      $region15: #{transition_block_forward.3} parent=11 // pred_region
        _
      $region16: #{transition_block_forward.3} parent=11 // pred_fallthru
        _
      // Predicated region
      $region17: #{transition_block_forward.3} parent=11 // pred_check
        %p159 = pneg %p92
      $region18: #{transition_block_forward.3} parent=11 // pred_check_branch
        %161 = sbr.rel (%p159) target = $region20
      $region19: #{transition_block_forward.3} parent=11 // pred_region
        _
      $region20: #{transition_block_forward.3} parent=11 // pred_fallthru
        _
      // Predicated region
      $region21: #{transition_block_forward.3} parent=11 // pred_check
        %p162 = pneg %p113
      $region22: #{transition_block_forward.3} parent=11 // pred_check_branch
        %164 = sbr.rel (%p162) target = $region24
      $region23: #{transition_block_forward.3} parent=11 // pred_region
        _
      $region24: #{transition_block_forward.3} parent=11 // pred_fallthru
        _
    $region12: #{transition_block_forward.3} parent=5 // pred_fallthru
      _
    %p165 = scmp.lt.s32.totalorder %s10, 2
    // Predicated region
    $region25: #{transition_block_forward.3} parent=5 // pred_check
      %p166 = pneg %p165
    $region26: #{transition_block_forward.3} parent=5 // pred_check_branch
      %168 = sbr.rel (%p166) target = $region28
    $region27: #{transition_block_forward.3} parent=5 // pred_region
      // Predicated region
      $region29: #{transition_block_forward.3} parent=27 // pred_check
        %p169 = pneg %p44
      $region30: #{transition_block_forward.3} parent=27 // pred_check_branch
        %171 = sbr.rel (%p169) target = $region32
      $region31: #{transition_block_forward.3} parent=27 // pred_region
        %s172 = smul.u32 16, %s18
        %p173 = scmp.lt.s32.totalorder %s17, 1
        %s174 = scalar_select %p173, %s17, 1
        %p175 = scmp.lt.s32.totalorder %s172, 15
        %s176 = scalar_select %p175, %s172, 15
        %s177 = smul.addr %s174, 16
        %s178 = sadd.s32 %s176, %s177
        %s179 = smul.addr %s178, 8
        %s180 = scalar_lea.vmem %s0, %s179
        %s181 = smul.u32 16, %s18
      $region32: #{transition_block_forward.3} parent=27 // pred_fallthru
        _
    $region28: #{transition_block_forward.3} parent=5 // pred_fallthru
      _
    %p182 = scmp.le.s32.totalorder 1, %s10
    %p183 = scmp.lt.s32.totalorder %s10, 3
    %p184 = pnand %p182, %p183
    %p185 = pneg %p184
    // Predicated region
    $region33: #{transition_block_forward.3} parent=5 // pred_check
      _
    $region34: #{transition_block_forward.3} parent=5 // pred_check_branch
      %187 = sbr.rel (%p184) target = $region36
    $region35: #{transition_block_forward.3} parent=5 // pred_region
      %s188 = ssub.s32 %s10, 1
      %s189 = smul.u32 16, %s20
      %p190 = scmp.lt.s32.totalorder %s19, 1
      %s191 = scalar_select %p190, %s19, 1
      %p192 = scmp.lt.s32.totalorder %s189, 15
      %s193 = scalar_select %p192, %s189, 15
      %s194 = smul.addr %s191, 16
      %s195 = sadd.s32 %s193, %s194
      %s196 = smul.addr %s195, 8
      %s197 = scalar_lea.vmem %s0, %s196
      %p198 = pneg %p50
      %p199 = pneg %p47
      %p200 = pneg %p71
      %p201 = pneg %p68
      %p202 = pneg %p92
      %p203 = pneg %p89
      %p204 = pneg %p113
      %p205 = pneg %p110
      %p206 = pneg %p141
      %p207 = pneg %p138
      %p208 = scmp.lt.s32.totalorder %s19, 1
      %s209 = scalar_select %p208, %s19, 1
      %p210 = scmp.lt.s32.totalorder %s20, 0
      %s211 = scalar_select %p210, %s20, 0
      %s212 = sadd.s32 %s211, %s209
      %s213 = smul.addr %s212, 8
      %s214 = scalar_lea.vmem %s4, %s213
      %s215 = smul.u32 16, %s20
      %p216 = scmp.lt.s32.totalorder %s19, 1
      %s217 = scalar_select %p216, %s19, 1
      %p218 = scmp.lt.s32.totalorder %s215, 15
      %s219 = scalar_select %p218, %s215, 15
      %s220 = smul.addr %s217, 16
      %s221 = sadd.s32 %s219, %s220
      %s222 = smul.addr %s221, 8
      %s223 = scalar_lea.vmem %s0, %s222
      %s224 = smul.u32 16, %s20
      %p225 = scmp.lt.s32.totalorder %s19, 1
      %s226 = scalar_select %p225, %s19, 1
      %p227 = scmp.lt.s32.totalorder %s20, 0
      %s228 = scalar_select %p227, %s20, 0
      %s229 = sadd.s32 %s228, %s226
      %s230 = smul.addr %s229, 8
      %s231 = scalar_lea.vmem %s4, %s230
      %v232 = vld [vmem:[%s223] sm:$0xff]
      %v233 = vld [vmem:[%s223 + $0x8] sm:$0xff]
      %v234 = vld [vmem:[%s223 + $0x10] sm:$0xff]
      %v235 = vld [vmem:[%s223 + $0x18] sm:$0xff]
      %v236 = vld [vmem:[%s223 + $0x20] sm:$0xff]
      %v237 = vld [vmem:[%s223 + $0x28] sm:$0xff]
      %v238 = vld [vmem:[%s223 + $0x30] sm:$0xff]
      %v239 = vld [vmem:[%s223 + $0x38] sm:$0xff]
      %v240 = vld [vmem:[%s223 + $0x40] sm:$0xff]
      %v241 = vld [vmem:[%s223 + $0x48] sm:$0xff]
      %v242 = vld [vmem:[%s223 + $0x50] sm:$0xff]
      %v243 = vld [vmem:[%s223 + $0x58] sm:$0xff]
      %v244 = vld [vmem:[%s223 + $0x60] sm:$0xff]
      %v245 = vld [vmem:[%s223 + $0x68] sm:$0xff]
      %v246 = vld [vmem:[%s223 + $0x70] sm:$0xff]
      %v247 = vld [vmem:[%s223 + $0x78] sm:$0xff]
      %v248 = vld [vmem:[%s1] sm:$0x1]
      %v249 = vld [vmem:[%s2] sm:$0x1]
      %v251 = vlaneseq
      %v252 = vshrl.u32 %v251, 7
      %v253 = vsub.s32 0, %v252
      %v254 = vrot.slane %v248, %v253
      %v256 = vmul.f32 %v232, %v254
      %v257 = vmul.f32 %v233, %v254
      %v258 = vmul.f32 %v234, %v254
      %v259 = vmul.f32 %v235, %v254
      %v260 = vmul.f32 %v236, %v254
      %v261 = vmul.f32 %v237, %v254
      %v262 = vmul.f32 %v238, %v254
      %v263 = vmul.f32 %v239, %v254
      %v264 = vmul.f32 %v240, %v254
      %v265 = vmul.f32 %v241, %v254
      %v266 = vmul.f32 %v242, %v254
      %v267 = vmul.f32 %v243, %v254
      %v268 = vmul.f32 %v244, %v254
      %v269 = vmul.f32 %v245, %v254
      %v270 = vmul.f32 %v246, %v254
      %v271 = vmul.f32 %v247, %v254
      %v273 = vlaneseq
      %v274 = vshrl.u32 %v273, 7
      %v275 = vsub.s32 0, %v274
      %v276 = vrot.slane %v249, %v275
      %v278 = vadd.f32 %v256, %v276
      %v279 = vadd.f32 %v257, %v276
      %v280 = vadd.f32 %v258, %v276
      %v281 = vadd.f32 %v259, %v276
      %v282 = vadd.f32 %v260, %v276
      %v283 = vadd.f32 %v261, %v276
      %v284 = vadd.f32 %v262, %v276
      %v285 = vadd.f32 %v263, %v276
      %v286 = vadd.f32 %v264, %v276
      %v287 = vadd.f32 %v265, %v276
      %v288 = vadd.f32 %v266, %v276
      %v289 = vadd.f32 %v267, %v276
      %v290 = vadd.f32 %v268, %v276
      %v291 = vadd.f32 %v269, %v276
      %v292 = vadd.f32 %v270, %v276
      %v293 = vadd.f32 %v271, %v276
      %v294 = vmax.f32 %v278, 0.0
      %v295 = vmax.f32 %v279, 0.0
      %v296 = vmax.f32 %v280, 0.0
      %v297 = vmax.f32 %v281, 0.0
      %v298 = vmax.f32 %v282, 0.0
      %v299 = vmax.f32 %v283, 0.0
      %v300 = vmax.f32 %v284, 0.0
      %v301 = vmax.f32 %v285, 0.0
      %v302 = vmax.f32 %v286, 0.0
      %v303 = vmax.f32 %v287, 0.0
      %v304 = vmax.f32 %v288, 0.0
      %v305 = vmax.f32 %v289, 0.0
      %v306 = vmax.f32 %v290, 0.0
      %v307 = vmax.f32 %v291, 0.0
      %v308 = vmax.f32 %v292, 0.0
      %v309 = vmax.f32 %v293, 0.0
      %326 = vrot.lane.b32.xlu0 %v294, 124
      %v327 = vpop.permute.xlu0 %326
      %328 = vrot.lane.b32.xlu0 %v295, 124
      %v329 = vpop.permute.xlu0 %328
      %330 = vrot.lane.b32.xlu0 %v296, 124
      %v331 = vpop.permute.xlu0 %330
      %332 = vrot.lane.b32.xlu0 %v297, 124
      %v333 = vpop.permute.xlu0 %332
      %334 = vrot.lane.b32.xlu0 %v298, 124
      %v335 = vpop.permute.xlu0 %334
      %336 = vrot.lane.b32.xlu0 %v299, 124
      %v337 = vpop.permute.xlu0 %336
      %338 = vrot.lane.b32.xlu0 %v300, 124
      %v339 = vpop.permute.xlu0 %338
      %340 = vrot.lane.b32.xlu0 %v301, 124
      %v341 = vpop.permute.xlu0 %340
      %342 = vrot.lane.b32.xlu0 %v302, 124
      %v343 = vpop.permute.xlu0 %342
      %344 = vrot.lane.b32.xlu0 %v303, 124
      %v345 = vpop.permute.xlu0 %344
      %346 = vrot.lane.b32.xlu0 %v304, 124
      %v347 = vpop.permute.xlu0 %346
      %348 = vrot.lane.b32.xlu0 %v305, 124
      %v349 = vpop.permute.xlu0 %348
      %350 = vrot.lane.b32.xlu0 %v306, 124
      %v351 = vpop.permute.xlu0 %350
      %352 = vrot.lane.b32.xlu0 %v307, 124
      %v353 = vpop.permute.xlu0 %352
      %354 = vrot.lane.b32.xlu0 %v308, 124
      %v355 = vpop.permute.xlu0 %354
      %356 = vrot.lane.b32.xlu0 %v309, 124
      %v357 = vpop.permute.xlu0 %356
      %v374 = vadd.f32 %v294, %v327
      %v375 = vadd.f32 %v295, %v329
      %v376 = vadd.f32 %v296, %v331
      %v377 = vadd.f32 %v297, %v333
      %v378 = vadd.f32 %v298, %v335
      %v379 = vadd.f32 %v299, %v337
      %v380 = vadd.f32 %v300, %v339
      %v381 = vadd.f32 %v301, %v341
      %v382 = vadd.f32 %v302, %v343
      %v383 = vadd.f32 %v303, %v345
      %v384 = vadd.f32 %v304, %v347
      %v385 = vadd.f32 %v305, %v349
      %v386 = vadd.f32 %v306, %v351
      %v387 = vadd.f32 %v307, %v353
      %v388 = vadd.f32 %v308, %v355
      %v389 = vadd.f32 %v309, %v357
      %v390 = vadd.f32 %v374, %v375
      %v391 = vadd.f32 %v376, %v377
      %v392 = vadd.f32 %v378, %v379
      %v393 = vadd.f32 %v380, %v381
      %v394 = vadd.f32 %v382, %v383
      %v395 = vadd.f32 %v384, %v385
      %v396 = vadd.f32 %v386, %v387
      %v397 = vadd.f32 %v388, %v389
      %v398 = vld [vmem:[%s3] sm:$0xff]
      %vm399 = vcmask 31744
      %v401 = vsel %vm399, %v398, 0
      %v404 = vsel %vm399, %v390, 0
      %v407 = vsel %vm399, %v391, 0
      %v410 = vsel %vm399, %v392, 0
      %v413 = vsel %vm399, %v393, 0
      %v416 = vsel %vm399, %v394, 0
      %v419 = vsel %vm399, %v395, 0
      %v422 = vsel %vm399, %v396, 0
      %v425 = vsel %vm399, %v397, 0
      %427 = vmatprep.subr.mxu0 0.0
      %428 = vmatpush1.xpose.msra.mxu0 %v404
      %429 = vmatprep.subr.mxu0 0.0
      %430 = vmatpush1.xpose.msra.mxu0 %v407
      %431 = vmatprep.subr.mxu0 0.0
      %432 = vmatpush1.xpose.msra.mxu0 %v410
      %433 = vmatprep.subr.mxu0 0.0
      %434 = vmatpush1.xpose.msra.mxu0 %v413
      %435 = vmatprep.subr.mxu0 0.0
      %436 = vmatpush1.xpose.msra.mxu0 %v416
      %437 = vmatprep.subr.mxu0 0.0
      %438 = vmatpush1.xpose.msra.mxu0 %v419
      %439 = vmatprep.subr.mxu0 0.0
      %440 = vmatpush1.xpose.msra.mxu0 %v422
      %441 = vmatprep.subr.mxu0 0.0
      %442 = vmatpush1.xpose.msra.mxu0 %v425
      %443 = vmatprep.subr.mxu0 0.0
      %444 = vmatpush1.xpose.msra.mxu0 0.0
      %445 = vmatprep.subr.mxu0 0.0
      %446 = vmatpush1.xpose.msra.mxu0 0.0
      %447 = vmatprep.subr.mxu0 0.0
      %448 = vmatpush1.xpose.msra.mxu0 0.0
      %449 = vmatprep.subr.mxu0 0.0
      %450 = vmatpush1.xpose.msra.mxu0 0.0
      %451 = vmatprep.subr.mxu0 0.0
      %452 = vmatpush1.xpose.msra.mxu0 0.0
      %453 = vmatprep.subr.mxu0 0.0
      %454 = vmatpush1.xpose.msra.mxu0 0.0
      %455 = vmatprep.subr.mxu0 0.0
      %456 = vmatpush1.xpose.msra.mxu0 0.0
      %457 = vmatprep.subr.mxu0 0.0
      %458 = vmatpush1.xpose.msra.mxu0 0.0
      %459 = vmatprep.subr.mxu0 0.0
      %460 = vmatpush1.xpose.msra.mxu0 0.0
      %461 = vmatprep.subr.mxu0 0.0
      %462 = vmatpush1.xpose.msra.mxu0 0.0
      %463 = vmatprep.subr.mxu0 0.0
      %464 = vmatpush1.xpose.msra.mxu0 0.0
      %465 = vmatprep.subr.mxu0 0.0
      %466 = vmatpush1.xpose.msra.mxu0 0.0
      %467 = vmatprep.subr.mxu0 0.0
      %468 = vmatpush1.xpose.msra.mxu0 0.0
      %469 = vmatprep.subr.mxu0 0.0
      %470 = vmatpush1.xpose.msra.mxu0 0.0
      %471 = vmatprep.subr.mxu0 0.0
      %472 = vmatpush1.xpose.msra.mxu0 0.0
      %473 = vmatprep.subr.mxu0 0.0
      %474 = vmatpush1.xpose.msra.mxu0 0.0
      %475 = vmatprep.subr.mxu0 0.0
      %476 = vmatpush1.xpose.msra.mxu0 0.0
      %477 = vmatprep.subr.mxu0 0.0
      %478 = vmatpush1.xpose.msra.mxu0 0.0
      %479 = vmatprep.subr.mxu0 0.0
      %480 = vmatpush1.xpose.msra.mxu0 0.0
      %481 = vmatprep.subr.mxu0 0.0
      %482 = vmatpush1.xpose.msra.mxu0 0.0
      %483 = vmatprep.subr.mxu0 0.0
      %484 = vmatpush1.xpose.msra.mxu0 0.0
      %485 = vmatprep.subr.mxu0 0.0
      %486 = vmatpush1.xpose.msra.mxu0 0.0
      %487 = vmatprep.subr.mxu0 0.0
      %488 = vmatpush1.xpose.msra.mxu0 0.0
      %489 = vmatprep.subr.mxu0 0.0
      %490 = vmatpush1.xpose.msra.mxu0 0.0
      %491 = vmatprep.mubr.f32.mxu0 0.0
      %492 = vmatmul.mubr.f32.gmra.mrb[0].mxu0 %v401
      %v493 = vpop.f32.mrb[0].mxu0
      %v494 = vadd.f32 0.0, %v493
      %v495 = vpop.f32.mrb[0].mxu0
      %496 = vdwg.mxu0
      %vm497 = vcmask 523264
      %498 = vst.msk [vmem:[%s231] sm:$0xff] %vm497, %v494
      %p499 = scmp.lt.s32.totalorder %s19, 1
      %s500 = scalar_select %p499, %s19, 1
      %p501 = scmp.lt.s32.totalorder %s20, 0
      %s502 = scalar_select %p501, %s20, 0
      %s503 = sadd.s32 %s502, %s500
      %s504 = smul.addr %s503, 8
      %s505 = scalar_lea.vmem %s4, %s504
      // Predicated region
      $region37: #{transition_block_forward.3} parent=35 // pred_check
        %p506 = pneg %p138
      $region38: #{transition_block_forward.3} parent=35 // pred_check_branch
        %508 = sbr.rel (%p506) target = $region40
      $region39: #{transition_block_forward.3} parent=35 // pred_region
        _
      $region40: #{transition_block_forward.3} parent=35 // pred_fallthru
        _
    $region36: #{transition_block_forward.3} parent=5 // pred_fallthru
      _
    %p509 = scmp.le.s32.totalorder 2, %s10
    // Predicated region
    $region41: #{transition_block_forward.3} parent=5 // pred_check
      %p510 = pneg %p509
    $region42: #{transition_block_forward.3} parent=5 // pred_check_branch
      %512 = sbr.rel (%p510) target = $region44
    $region43: #{transition_block_forward.3} parent=5 // pred_region
      %s513 = ssub.s32 %s10, 2
      // Predicated region
      $region45: #{transition_block_forward.3} parent=43 // pred_check
        %p514 = pneg %p144
      $region46: #{transition_block_forward.3} parent=43 // pred_check_branch
        %516 = sbr.rel (%p514) target = $region48
      $region47: #{transition_block_forward.3} parent=43 // pred_region
        %p517 = scmp.lt.s32.totalorder %s21, 1
        %s518 = scalar_select %p517, %s21, 1
        %p519 = scmp.lt.s32.totalorder %s22, 0
        %s520 = scalar_select %p519, %s22, 0
        %s521 = sadd.s32 %s520, %s518
        %s522 = smul.addr %s521, 8
        %s523 = scalar_lea.vmem %s4, %s522
      $region48: #{transition_block_forward.3} parent=43 // pred_fallthru
        _
    $region44: #{transition_block_forward.3} parent=5 // pred_fallthru
      _
  $region6: #{transition_block_forward.3} parent=0 // loop_footer
    %s14 = sadd.s32 1, %s10
  $region7: #{transition_block_forward.3} parent=0 // loop_footer_branch
    %9 = sbr.rel target = $region3
  $region8: #{transition_block_forward.3} parent=0 // loop_exit
    _

</llo_original>
